<compile_context>
chip_gen: v7x
topology: tpu7x:2x2x1
jax: 0.10.0
libtpu: 0.0.40
codegen_flags: <defaults>
</compile_context>

<pallas_src>
import math

import jax
import jax.numpy as jnp
from jax.experimental import pallas as pl
from jax.experimental.pallas import tpu as pltpu


NUM_GROUPS = 32
EPS = 1e-6


def _vmem_limit_bytes():
    """Per-generation scoped-VMEM budget: ~96 MiB on 128-MiB parts (v5e/v6e),
    ~48 MiB on 64-MiB parts (v7x), conservative default if the query fails."""
    cap = 64 * 1024 * 1024
    try:
        cap = int(pltpu.get_tpu_info().vmem_capacity_bytes)
    except Exception:   # interpret mode / API mismatch -> keep the default
        pass
    return max(32 * 1024 * 1024, min(cap * 3 // 4, 100 * 1024 * 1024))


def _pick_tile(n, target):
    """Largest multiple-of-128 tile <= target that divides n, else the full n.

    Multiples of 128 keep lane dims dense (unmasked vst), bf16 sublanes fully
    packed and MXU passes unpadded; the full extent is always a legal block."""
    t = min(target, n)
    t -= t % 128
    while t >= 128:
        if n % t == 0:
            return t
        t -= 128
    return n


def _buffered_spec(block_shape, index_map, depth=3):
    """BlockSpec with deeper multi-buffering when available (hides the per-kv-step
    DMA on v5e; cheap on v6e/v7x).  Falls back to a plain double-buffered spec."""
    if hasattr(pl, "Buffered"):
        try:
            return pl.BlockSpec(block_shape, index_map,
                                pipeline_mode=pl.Buffered(depth))
        except TypeError:
            pass
    return pl.BlockSpec(block_shape, index_map)


# ---------------- pass 1: GroupNorm statistics (reduction over HW) ----------

def gn_stats_kernel(x_ref, stat_ref):
    """x block (1, C, t); accumulate per-channel [sum, sum^2] into (1, C, 2)."""
    @pl.when(pl.program_id(1) == 0)
    def _():
        stat_ref[...] = jnp.zeros_like(stat_ref)

    xt = x_ref[0]                                          # (C, t) f32
    s1 = jnp.sum(xt, axis=-1, keepdims=True)               # (C, 1)
    s2 = jnp.sum(xt * xt, axis=-1, keepdims=True)          # (C, 1)
    stat_ref[0] += jnp.concatenate([s1, s2], axis=-1)      # (C, 2)


# ---------------- shared flash-attention pieces ------------------------------

def _flash_step(q, k, v, m_sc, l_sc, acc_sc):
    """One online-softmax update. q:(tq,C), k/v:(tkv,C) bf16.  m/l scratch are
    lane-replicated (tq, 128) so every per-step scratch access is a full,
    unmasked vreg load/store (no vst.msk / relayout per kv step)."""
    s = jax.lax.dot_general(q, k, (((1,), (1,)), ((), ())),
                            preferred_element_type=jnp.float32)     # (tq, tkv)
    m_prev = m_sc[...]                                               # (tq, 128)
    m_new = jnp.maximum(m_prev, jnp.max(s, axis=-1, keepdims=True))  # replicated
    alpha = jnp.exp(m_prev[:, :1] - m_new[:, :1])                    # (tq, 1)
    p = jnp.exp(s - m_new[:, :1])                                    # (tq, tkv)
    l_sc[...] = alpha * l_sc[...] + jnp.sum(p, axis=-1, keepdims=True)
    acc_sc[...] = alpha * acc_sc[...] + jnp.dot(
        p.astype(jnp.bfloat16), v, preferred_element_type=jnp.float32)
    m_sc[...] = m_new


def _flash_finalize(x_res, wp, bp, o_ref, l_sc, acc_sc):
    """Deferred softmax normalization + proj_out (emitted channels-first via a
    trans_b matmul, so no output transpose is needed) + residual add."""
    # approx EUP reciprocal: ~1e-3 rel error, well within the bf16-level tolerance.
    inv_l = pl.reciprocal(l_sc[...][:, :1], approx=True)             # (tq, 1)
    attn = (acc_sc[...] * inv_l).astype(jnp.bfloat16)                # (tq, C)
    proj = jax.lax.dot_general(wp, attn, (((1,), (1,)), ((), ())),
                               preferred_element_type=jnp.float32)   # (C, tq)
    o_ref[0] = x_res + proj + bp


# ---------------- fused path: norm + qkv + flash attn + proj + residual -----

def fused_attn_kernel(xq_ref, xkv_ref, scale_ref, shift_ref,
                      wq_ref, bq_ref, wk_ref, bk_ref, wv_ref, bv_ref,
                      wp_ref, bp_ref, o_ref,
                      k_sc, v_sc, q_sc, m_sc, l_sc, acc_sc):
    qi = pl.program_id(1)
    kj = pl.program_id(2)

    @pl.when(kj == 0)
    def _():
        # New q tile: GroupNorm (prefolded per-channel scale/shift) + q
        # projection (attention scale folded into wq/bq).
        hn = xq_ref[0] * scale_ref[0] + shift_ref[0]                 # (C, tq) f32
        hn = hn.T.astype(jnp.bfloat16)                               # (tq, C)
        q = jnp.dot(hn, wq_ref[...], preferred_element_type=jnp.float32)
        q_sc[...] = (q + bq_ref[...]).astype(jnp.bfloat16)
        m_sc[...] = jnp.full_like(m_sc, -jnp.inf)
        l_sc[...] = jnp.zeros_like(l_sc)
        acc_sc[...] = jnp.zeros_like(acc_sc)

    @pl.when(qi == 0)
    def _():
        # First q tile of this batch element: build K/V cache tile kj in VMEM
        # (reused by every later q tile of the same batch -> no HBM round trip).
        hn = xkv_ref[0] * scale_ref[0] + shift_ref[0]                # (C, tkv) f32
        hn = hn.T.astype(jnp.bfloat16)                               # (tkv, C)
        k = jnp.dot(hn, wk_ref[...], preferred_element_type=jnp.float32)
        v = jnp.dot(hn, wv_ref[...], preferred_element_type=jnp.float32)
        k_sc[kj] = (k + bk_ref[...]).astype(jnp.bfloat16)
        v_sc[kj] = (v + bv_ref[...]).astype(jnp.bfloat16)

    _flash_step(q_sc[...], k_sc[kj], v_sc[kj], m_sc, l_sc, acc_sc)

    @pl.when(kj == pl.num_programs(2) - 1)
    def _():
        _flash_finalize(xq_ref[0], wp_ref[...], bp_ref[...], o_ref, l_sc, acc_sc)


# ---------------- fallback path (very large HW*C): 3 passes ------------------

def norm_qkv_kernel(x_ref, scale_ref, shift_ref, wqkv_ref, bqkv_ref, qkv_ref):
    hn = x_ref[0] * scale_ref[0] + shift_ref[0]                      # (C, t) f32
    hn = hn.T.astype(jnp.bfloat16)                                   # (t, C)
    qkv = jnp.dot(hn, wqkv_ref[...], preferred_element_type=jnp.float32)
    qkv_ref[0] = (qkv + bqkv_ref[...]).astype(jnp.bfloat16)          # lane-dense (t, 3C)


def flash_attn_kernel(q_ref, k_ref, v_ref, xres_ref, wp_ref, bp_ref, o_ref,
                      m_sc, l_sc, acc_sc):
    kj = pl.program_id(2)

    @pl.when(kj == 0)
    def _():
        m_sc[...] = jnp.full_like(m_sc, -jnp.inf)
        l_sc[...] = jnp.zeros_like(l_sc)
        acc_sc[...] = jnp.zeros_like(acc_sc)

    _flash_step(q_ref[0], k_ref[0], v_ref[0], m_sc, l_sc, acc_sc)

    @pl.when(kj == pl.num_programs(2) - 1)
    def _():
        _flash_finalize(xres_ref[0], wp_ref[...], bp_ref[...], o_ref, l_sc, acc_sc)


# ---------------- wrapper -----------------------------------------------------

def _fused_vmem_bytes(hw, c, t_q, t_kv):
    cache = 2 * hw * c * 2                                 # resident bf16 K/V caches
    scratch = t_q * c * 2 + t_q * c * 4 + 2 * t_q * 128 * 4
    blocks = 2 * 4 * c * (2 * t_q + t_kv)                  # x_q, x_kv, out (f32, 2x buffered)
    weights = 2 * (4 * c * c * 2 + 4 * c * 4)              # 4 bf16 weight mats + biases
    return cache + scratch + blocks + weights


def attn_block(x_nchw, params, *, t_q=256, t_kv=512, t_hw=512, t_stats=1024,
               force_three_pass=False):
    """x_nchw: (B, C, H, W) float32.  params: dict of weights (see init_params)."""
    b, c, h, w = x_nchw.shape
    assert c % NUM_GROUPS == 0, "GroupNorm(32, C) requires C % 32 == 0"
    hw = h * w
    g = NUM_GROUPS
    vmem_limit = _vmem_limit_bytes()

    # Channels-first (B, C, HW) everywhere -> reshape only, no transposes.
    x = x_nchw.reshape(b, c, hw)

    t_s = _pick_tile(hw, t_stats)
    t_q_ = _pick_tile(hw, t_q)
    t_kv_ = _pick_tile(hw, t_kv)

    # ---- pass 1: per-channel [sum, sum^2] over HW ----
    stats = pl.pallas_call(
        gn_stats_kernel,
        out_shape=jax.ShapeDtypeStruct((b, c, 2), jnp.float32),
        grid_spec=pltpu.PrefetchScalarGridSpec(
            num_scalar_prefetch=0,
            grid=(b, hw // t_s),
            in_specs=[pl.BlockSpec((1, c, t_s), lambda bi, hi: (bi, 0, hi))],
            out_specs=pl.BlockSpec((1, c, 2), lambda bi, hi: (bi, 0, 0)),
        ),
        compiler_params=pltpu.CompilerParams(
            dimension_semantics=("parallel", "arbitrary"),
            vmem_limit_bytes=vmem_limit),
    )(x)

    # ---- tiny per-group pooling + affine folding (plain JAX on (B, 32)) ----
    gamma = params["gamma"].reshape(c)
    beta = params["beta"].reshape(c)
    n_pg = float(hw * (c // g))
    g_sum = stats[..., 0].reshape(b, g, c // g).sum(axis=-1)
    g_sqs = stats[..., 1].reshape(b, g, c // g).sum(axis=-1)
    mean_g = g_sum / n_pg
    # E[x^2]-E[x]^2 in f32, clamped; fine for unit-scale VQGAN activations.
    # TODO(synk): use a two-pass / Welford reduction if activations can carry
    # large DC offsets (catastrophic cancellation risk).
    var_g = jnp.maximum(g_sqs / n_pg - mean_g * mean_g, 0.0)
    inv_g = jax.lax.rsqrt(var_g + EPS)
    mean_c = jnp.repeat(mean_g, c // g, axis=1)                      # (B, C)
    inv_c = jnp.repeat(inv_g, c // g, axis=1)                        # (B, C)
    scale_c = (inv_c * gamma[None, :]).reshape(b, c, 1)
    shift_c = (beta[None, :] - mean_c * inv_c * gamma[None, :]).reshape(b, c, 1)

    # ---- weight prep: fold c^-0.5 into q, bf16 MXU operands ----
    att_scale = float(c) ** (-0.5)
    wq_t = (params["wq"].reshape(c, c).T * att_scale).astype(jnp.bfloat16)  # (Cin, Cout)
    wk_t = params["wk"].reshape(c, c).T.astype(jnp.bfloat16)
    wv_t = params["wv"].reshape(c, c).T.astype(jnp.bfloat16)
    wp_n = params["wp"].reshape(c, c).astype(jnp.bfloat16)                  # native (Cout, Cin)
    bq = (params["bq"] * att_scale).reshape(1, c).astype(jnp.float32)
    bk = params["bk"].reshape(1, c).astype(jnp.float32)
    bv = params["bv"].reshape(1, c).astype(jnp.float32)
    bp = params["bp"].reshape(c, 1).astype(jnp.float32)

    fused_fits = _fused_vmem_bytes(hw, c, t_q_, t_kv_) <= int(0.85 * vmem_limit)
    three_pass_ok = (c % 128 == 0)   # fallback slices a (B, HW, 3C) array in C-wide blocks

    if (fused_fits and not force_three_pass) or not three_pass_ok:
        # ---- fused: norm + qkv + flash attention + proj_out + residual ----
        n_q, n_kv = hw // t_q_, hw // t_kv_
        out = pl.pallas_call(
            fused_attn_kernel,
            out_shape=jax.ShapeDtypeStruct((b, c, hw), jnp.float32),
            grid_spec=pltpu.PrefetchScalarGridSpec(
                num_scalar_prefetch=0,
                grid=(b, n_q, n_kv),
                in_specs=[
                    pl.BlockSpec((1, c, t_q_), lambda bi, qi, ki: (bi, 0, qi)),   # x (q + residual)
                    # x tile for K/V is only consumed at qi == 0; pin the block
                    # index afterwards so it is not re-fetched every kv step.
                    pl.BlockSpec((1, c, t_kv_),
                                 lambda bi, qi, ki: (bi, 0, jnp.where(qi == 0, ki, 0))),
                    pl.BlockSpec((1, c, 1), lambda bi, qi, ki: (bi, 0, 0)),       # scale
                    pl.BlockSpec((1, c, 1), lambda bi, qi, ki: (bi, 0, 0)),       # shift
                    pl.BlockSpec((c, c), lambda bi, qi, ki: (0, 0)),              # wq^T
                    pl.BlockSpec((1, c), lambda bi, qi, ki: (0, 0)),              # bq
                    pl.BlockSpec((c, c), lambda bi, qi, ki: (0, 0)),              # wk^T
                    pl.BlockSpec((1, c), lambda bi, qi, ki: (0, 0)),              # bk
                    pl.BlockSpec((c, c), lambda bi, qi, ki: (0, 0)),              # wv^T
                    pl.BlockSpec((1, c), lambda bi, qi, ki: (0, 0)),              # bv
                    pl.BlockSpec((c, c), lambda bi, qi, ki: (0, 0)),              # wp (native)
                    pl.BlockSpec((c, 1), lambda bi, qi, ki: (0, 0)),              # bp
                ],
                out_specs=pl.BlockSpec((1, c, t_q_), lambda bi, qi, ki: (bi, 0, qi)),
                scratch_shapes=[
                    pltpu.VMEM((n_kv, t_kv_, c), jnp.bfloat16),   # K cache (per batch elem)
                    pltpu.VMEM((n_kv, t_kv_, c), jnp.bfloat16),   # V cache
                    pltpu.VMEM((t_q_, c), jnp.bfloat16),          # q tile
                    pltpu.VMEM((t_q_, 128), jnp.float32),         # running max (lane-replicated)
                    pltpu.VMEM((t_q_, 128), jnp.float32),         # running denom
                    pltpu.VMEM((t_q_, c), jnp.float32),           # output accumulator
                ],
            ),
            compiler_params=pltpu.CompilerParams(
                # qi must stay sequential ("arbitrary"): the K/V cache filled at
                # qi == 0 is reused by later q tiles of the same batch element.
                # On v7x megacore the batch axis shards across the two cores.
                dimension_semantics=("parallel", "arbitrary", "arbitrary"),
                vmem_limit_bytes=vmem_limit),
        )(x, x, scale_c, shift_c, wq_t, bq, wk_t, bk, wv_t, bv, wp_n, bp)
        return out.reshape(b, c, h, w)

    # ---------------- fallback 3-pass path (K/V cache would not fit VMEM) ----
    t_n = _pick_tile(hw, t_hw)
    wqkv = jnp.concatenate([wq_t, wk_t, wv_t], axis=1)               # (C, 3C) bf16
    bqkv = jnp.concatenate([bq, bk, bv], axis=1)                     # (1, 3C) f32

    qkv = pl.pallas_call(
        norm_qkv_kernel,
        out_shape=jax.ShapeDtypeStruct((b, hw, 3 * c), jnp.bfloat16),
        grid_spec=pltpu.PrefetchScalarGridSpec(
            num_scalar_prefetch=0,
            grid=(b, hw // t_n),
            in_specs=[
                pl.BlockSpec((1, c, t_n), lambda bi, hi: (bi, 0, hi)),
                pl.BlockSpec((1, c, 1), lambda bi, hi: (bi, 0, 0)),
                pl.BlockSpec((1, c, 1), lambda bi, hi: (bi, 0, 0)),
                pl.BlockSpec((c, 3 * c), lambda bi, hi: (0, 0)),
                pl.BlockSpec((1, 3 * c), lambda bi, hi: (0, 0)),
            ],
            out_specs=pl.BlockSpec((1, t_n, 3 * c), lambda bi, hi: (bi, hi, 0)),
        ),
        compiler_params=pltpu.CompilerParams(
            dimension_semantics=("parallel", "parallel"),
            vmem_limit_bytes=vmem_limit),
    )(x, scale_c, shift_c, wqkv, bqkv)

    out = pl.pallas_call(
        flash_attn_kernel,
        out_shape=jax.ShapeDtypeStruct((b, c, hw), jnp.float32),
        grid_spec=pltpu.PrefetchScalarGridSpec(
            num_scalar_prefetch=0,
            grid=(b, hw // t_q_, hw // t_kv_),
            in_specs=[
                pl.BlockSpec((1, t_q_, c), lambda bi, qi, ki: (bi, qi, 0)),       # q slice
                _buffered_spec((1, t_kv_, c), lambda bi, qi, ki: (bi, ki, 1)),    # k slice
                _buffered_spec((1, t_kv_, c), lambda bi, qi, ki: (bi, ki, 2)),    # v slice
                pl.BlockSpec((1, c, t_q_), lambda bi, qi, ki: (bi, 0, qi)),       # residual
                pl.BlockSpec((c, c), lambda bi, qi, ki: (0, 0)),                  # wp
                pl.BlockSpec((c, 1), lambda bi, qi, ki: (0, 0)),                  # bp
            ],
            out_specs=pl.BlockSpec((1, c, t_q_), lambda bi, qi, ki: (bi, 0, qi)),
            scratch_shapes=[
                pltpu.VMEM((t_q_, 128), jnp.float32),
                pltpu.VMEM((t_q_, 128), jnp.float32),
                pltpu.VMEM((t_q_, c), jnp.float32),
            ],
        ),
        compiler_params=pltpu.CompilerParams(
            dimension_semantics=("parallel", "parallel", "arbitrary"),
            vmem_limit_bytes=vmem_limit),
    )(qkv, qkv, qkv, x, wp_n, bp)

    return out.reshape(b, c, h, w)


# ---------------- params / reference -----------------------------------------

def init_params(key, c):
    """Deterministic synthetic parameters matching the module's shapes."""
    ks = jax.random.split(key, 10)
    scale = 1.0 / math.sqrt(c)
    return {
        "gamma": 1.0 + 0.1 * jax.random.normal(ks[8], (c,), jnp.float32),
        "beta": 0.1 * jax.random.normal(ks[9], (c,), jnp.float32),
        "wq": jax.random.normal(ks[0], (c, c, 1, 1), jnp.float32) * scale,
        "bq": jax.random.normal(ks[1], (c,), jnp.float32) * 0.01,
        "wk": jax.random.normal(ks[2], (c, c, 1, 1), jnp.float32) * scale,
        "bk": jax.random.normal(ks[3], (c,), jnp.float32) * 0.01,
        "wv": jax.random.normal(ks[4], (c, c, 1, 1), jnp.float32) * scale,
        "bv": jax.random.normal(ks[5], (c,), jnp.float32) * 0.01,
        "wp": jax.random.normal(ks[6], (c, c, 1, 1), jnp.float32) * scale,
        "bp": jax.random.normal(ks[7], (c,), jnp.float32) * 0.01,
    }


def attn_block_reference(x_nchw, params):
    """Pure-JAX f32 reference mirroring the PyTorch forward (for validation)."""
    b, c, h, w = x_nchw.shape
    g = NUM_GROUPS
    xg = x_nchw.reshape(b, g, c // g, h, w)
    mean = xg.mean(axis=(2, 3, 4), keepdims=True)
    var = xg.var(axis=(2, 3, 4), keepdims=True)
    hn = ((xg - mean) / jnp.sqrt(var + EPS)).reshape(b, c, h, w)
    hn = hn * params["gamma"].reshape(1, c, 1, 1) + params["beta"].reshape(1, c, 1, 1)

    def conv1x1(t, wgt, bias):
        return jnp.einsum("bchw,oc->bohw", t, wgt.reshape(c, c)) + bias.reshape(1, c, 1, 1)

    q = conv1x1(hn, params["wq"], params["bq"]).reshape(b, c, h * w)
    k = conv1x1(hn, params["wk"], params["bk"]).reshape(b, c, h * w)
    v = conv1x1(hn, params["wv"], params["bv"]).reshape(b, c, h * w)
    qT = jnp.transpose(q, (0, 2, 1))                          # (b, hw, c)
    w_ = jnp.einsum("bic,bcj->bij", qT, k) * (float(c) ** -0.5)
    w_ = jax.nn.softmax(w_, axis=2)
    h_ = jnp.einsum("bcj,bij->bci", v, w_).reshape(b, c, h, w)
    h_ = conv1x1(h_, params["wp"], params["bp"])
    return x_nchw + h_


if __name__ == "__main__":
    # C multiple of 32 (GroupNorm requirement) and of 128 (lane-dense tiles,
    # realistic VQGAN channel counts are 128/256/512).
    B, C, H, W = 2, 128, 16, 16
    key = jax.random.PRNGKey(0)
    kx, kp = jax.random.split(key)
    x = jax.random.normal(kx, (B, C, H, W), jnp.float32)
    params = init_params(kp, C)

    ref = attn_block_reference(x, params)

    # fused path; small tiles so the multi-tile online-softmax path is exercised
    out = jax.block_until_ready(
        attn_block(x, params, t_q=128, t_kv=128, t_hw=128, t_stats=128))
    assert out.shape == (B, C, H, W)
    err = float(jnp.max(jnp.abs(out - ref)))
    # bf16 MXU inputs (f32 accumulation) + approx reciprocal -> bf16-level tolerance
    assert err < 8e-2, f"fused path mismatch vs JAX reference: {err}"

    # fallback 3-pass path (kept tested so the large-HW*C route stays healthy)
    out3 = jax.block_until_ready(
        attn_block(x, params, t_q=128, t_kv=128, t_hw=128, t_stats=128,
                   force_three_pass=True))
    err3 = float(jnp.max(jnp.abs(out3 - ref)))
    assert err3 < 8e-2, f"three-pass path mismatch vs JAX reference: {err3}"

    print("KERNEL_OK")
</pallas_src>

<mosaic_0001>
module attributes {stable_mosaic.version = 11 : i64} {
  func.func @gn_stats_kernel(%arg0: i32, %arg1: i32, %arg2: memref<1x128x128xf32, #tpu.memory_space<vmem>>, %arg3: memref<1x128x2xf32, #tpu.memory_space<vmem>>) attributes {dimension_semantics = [#tpu.dimension_semantics<parallel>, #tpu.dimension_semantics<arbitrary>], iteration_bounds = array<i64: 2, 2>, scalar_prefetch = 0 : i64, scratch_operands = 0 : i64, tpu.core_type = #tpu.core_type<tc>, window_params = [{transform_indices = @transform_0, window_bounds = array<i64: 1, 128, 128>}, {transform_indices = @transform_1, window_bounds = array<i64: 1, 128, 2>}]} {
    %c0_i32 = arith.constant 0 : i32
    %0 = arith.cmpi eq, %arg1, %c0_i32 : i32
    %1 = arith.extui %0 : i1 to i32
    %c0_i32_0 = arith.constant 0 : i32
    %2 = arith.cmpi ne, %1, %c0_i32_0 : i32
    scf.if %2 {
      %cst_10 = arith.constant 0.000000e+00 : f32
      %17 = vector.broadcast %cst_10 : f32 to vector<1x128x2xf32>
      %c0_11 = arith.constant 0 : index
      %c0_12 = arith.constant 0 : index
      %c0_13 = arith.constant 0 : index
      %18 = vector.load %arg3[%c0_11, %c0_12, %c0_13] : memref<1x128x2xf32, #tpu.memory_space<vmem>>, vector<1x128x2xf32>
      tpu.vector_store %arg3[%c0_11, %c0_12, %c0_13], %17 {strides = array<i32>} : memref<1x128x2xf32, #tpu.memory_space<vmem>>, vector<1x128x2xf32>,
    } else {
    }
    %c0 = arith.constant 0 : index
    %c0_1 = arith.constant 0 : index
    %c0_2 = arith.constant 0 : index
    %3 = vector.load %arg2[%c0, %c0_1, %c0_2] : memref<1x128x128xf32, #tpu.memory_space<vmem>>, vector<1x128x128xf32>
    %4 = vector.shape_cast %3 : vector<1x128x128xf32> to vector<128x128xf32>
    %cst = arith.constant dense<0.000000e+00> : vector<128xf32>
    %5 = vector.multi_reduction <add>, %4, %cst [1] : vector<128x128xf32> to vector<128xf32>
    %6 = vector.shape_cast %5 : vector<128xf32> to vector<128x1xf32>
    %7 = arith.mulf %4, %4 : vector<128x128xf32>
    %cst_3 = arith.constant dense<0.000000e+00> : vector<128xf32>
    %8 = vector.multi_reduction <add>, %7, %cst_3 [1] : vector<128x128xf32> to vector<128xf32>
    %9 = vector.shape_cast %8 : vector<128xf32> to vector<128x1xf32>
    %c0_4 = arith.constant 0 : index
    %c0_5 = arith.constant 0 : index
    %c0_6 = arith.constant 0 : index
    %10 = vector.load %arg3[%c0_4, %c0_5, %c0_6] : memref<1x128x2xf32, #tpu.memory_space<vmem>>, vector<1x128x2xf32>
    %11 = vector.shape_cast %10 : vector<1x128x2xf32> to vector<128x2xf32>
    %12 = tpu.concatenate %6, %9 in 1 : vector<128x1xf32>, vector<128x1xf32> -> vector<128x2xf32>
    %13 = arith.addf %11, %12 : vector<128x2xf32>
    %c0_7 = arith.constant 0 : index
    %c0_8 = arith.constant 0 : index
    %c0_9 = arith.constant 0 : index
    %14 = vector.load %arg3[%c0_7, %c0_8, %c0_9] : memref<1x128x2xf32, #tpu.memory_space<vmem>>, vector<1x128x2xf32>
    %15 = vector.shape_cast %14 : vector<1x128x2xf32> to vector<128x2xf32>
    %16 = vector.shape_cast %13 : vector<128x2xf32> to vector<1x128x2xf32>
    tpu.vector_store %arg3[%c0_7, %c0_8, %c0_9], %16 {strides = array<i32>} : memref<1x128x2xf32, #tpu.memory_space<vmem>>, vector<1x128x2xf32>,
    return
  }
  func.func @transform_0(%arg0: i32, %arg1: i32) -> (i32, i32, i32) {
    %c0_i32 = arith.constant 0 : i32
    %c0_i32_0 = arith.constant 0 : i32
    return %arg0, %c0_i32, %arg1 : i32, i32, i32
  }
  func.func @transform_1(%arg0: i32, %arg1: i32) -> (i32, i32, i32) {
    %c0_i32 = arith.constant 0 : i32
    %c0_i32_0 = arith.constant 0 : i32
    %c0_i32_1 = arith.constant 0 : i32
    return %arg0, %c0_i32, %c0_i32_0 : i32, i32, i32
  }
}

</mosaic_0001>

<llo_original>
// kernel: tpu_custom_call.1
$region0: #{tpu_custom_call.1}
  #allocation0 [shape = 'u32[]', space=smem, size = 0x4, offset = 0x4, fixed_abs, tag = 'smem constant byte address 0x4 - core index']
  #allocation1 [shape = 'u32[144,128]{1,0:T(1,128)}', space=vmem, size = 0x12000, scoped, tag = 'internal scratch']
  %s0 = inlined_call_operand.hbm [shape: f32[2,128,256], index: 0, kind: input, shape index: {}]
  %s1 = inlined_call_operand.vmem [shape: f32[2,128,2], index: 1, kind: output, shape index: {}]
  %s2 = sld [smem:[#allocation0]]
  $region45: #{tpu_custom_call.1} parent=0
    _
  %s4 = ssub.s32 1, %s2
  %s5 = scalar_select 0, %s4, %s2
  $region1: #{tpu_custom_call.1} parent=0
    #allocation2 [shape = 'u8[131072]{0}', space=vmem, size = 0x20000, scoped, tag = 'input window, operand 0']
    #allocation3 [shape = 's32[2]{0}', space=sflag, size = 0x8, scoped, tag = 'scoped memory for tpu_custom_call.1']
    %6 = vsyncpa [#allocation3], 0
    %s7 = scalar_lea.sflag [#allocation3], 1
    %8 = vsyncpa %s7, 0
    loop: start=0, step=1, limit=6
    $region2: #{tpu_custom_call.1} parent=1 // loop_pre_header
      _
    $region3: #{tpu_custom_call.1} parent=1 // loop_header
      %s10 = sphi 0, %s14
      %p11 = scmp.ge.s32.totalorder %s10, 6
      %s17 = sphi 0, %s29
      %s18 = sphi 0, %s25
      %s19 = sphi 0, %s17
      %s20 = sphi 0, %s18
      %s21 = sphi 0, %s19
      %s22 = sphi 0, %s20
      %s34 = sphi 0, %s36
      %s37 = sphi 0, %s34
      %s38 = sphi 0, %s37
      %s54 = sphi 0, %s38
      %s60 = sphi 0, %s62
      %s63 = sphi 0, %s60
      %s64 = sphi 0, %s63
      %s80 = sphi 0, %s64
    $region4: #{tpu_custom_call.1} parent=1 // loop_header_branch
      %13 = sbr.rel (%p11) target = $region8
    $region5: #{tpu_custom_call.1} parent=1 // loop_body
      %s15 = ssub.s32 %s10, 1
      %s16 = ssub.s32 %s10, 2
      %s23 = sadd.s32 1, %s18
      %p24 = scmp.ge.s32.totalorder %s23, 2
      %s25 = scalar_select %p24, 0, %s23
      %s26 = sadd.s32 1, %s17
      %s27 = scalar_select %p24, %s26, %s17
      %p28 = scmp.ge.s32.totalorder %s27, 2
      %s29 = scalar_select %p28, 0, %s27
      %s30 = ssub.s32 %s17, %s29
      %s31 = ssub.s32 %s18, %s25
      %s32 = sor.u32 %s30, %s31
      %p33 = scmp.eq.s32.totalorder %s32, 0
      %s35 = sadd.s32 %s34, 1
      %s36 = scalar_select %p33, %s34, %s35
      %p39 = pneg %p33
      %p40 = scmp.eq.s32.totalorder %s10, 3
      %p41 = por %p39, %p40
      %p42 = scmp.ne.s32.totalorder %s34, %s37
      %p43 = scmp.eq.s32.totalorder %s10, 0
      %p44 = por %p42, %p43
      %p45 = scmp.ne.s32.totalorder %s34, %s37
      %p46 = scmp.eq.s32.totalorder %s15, 3
      %p47 = por %p45, %p46
      %p48 = scmp.ne.s32.totalorder %s37, %s38
      %p49 = scmp.eq.s32.totalorder %s15, 0
      %p50 = por %p48, %p49
      %p51 = scmp.ne.s32.totalorder %s37, %s38
      %p52 = scmp.eq.s32.totalorder %s16, 3
      %p53 = por %p51, %p52
      %p55 = scmp.ne.s32.totalorder %s38, %s54
      %p56 = scmp.eq.s32.totalorder %s16, 0
      %p57 = por %p55, %p56
      %s58 = ssub.s32 %s17, %s29
      %p59 = scmp.eq.s32.totalorder %s58, 0
      %s61 = sadd.s32 %s60, 1
      %s62 = scalar_select %p59, %s60, %s61
      %p65 = pneg %p59
      %p66 = scmp.eq.s32.totalorder %s10, 3
      %p67 = por %p65, %p66
      %p68 = scmp.ne.s32.totalorder %s60, %s63
      %p69 = scmp.eq.s32.totalorder %s10, 0
      %p70 = por %p68, %p69
      %p71 = scmp.ne.s32.totalorder %s60, %s63
      %p72 = scmp.eq.s32.totalorder %s15, 3
      %p73 = por %p71, %p72
      %p74 = scmp.ne.s32.totalorder %s63, %s64
      %p75 = scmp.eq.s32.totalorder %s15, 0
      %p76 = por %p74, %p75
      %p77 = scmp.ne.s32.totalorder %s63, %s64
      %p78 = scmp.eq.s32.totalorder %s16, 3
      %p79 = por %p77, %p78
      %p81 = scmp.ne.s32.totalorder %s64, %s80
      %p82 = scmp.eq.s32.totalorder %s16, 0
      %p83 = por %p81, %p82
      %p84 = scmp.le.s32.totalorder 1, %s10
      %p85 = scmp.lt.s32.totalorder %s10, 5
      %p86 = pnand %p84, %p85
      %p87 = pneg %p86
      // Predicated region
      $region9: #{tpu_custom_call.1} parent=5 // pred_check
        _
      $region10: #{tpu_custom_call.1} parent=5 // pred_check_branch
        %89 = sbr.rel (%p86) target = $region12
      $region11: #{tpu_custom_call.1} parent=5 // pred_region
        %s90 = ssub.s32 %s10, 1
      $region12: #{tpu_custom_call.1} parent=5 // pred_fallthru
        _
      %p91 = scmp.lt.s32.totalorder %s10, 4
      // Predicated region
      $region13: #{tpu_custom_call.1} parent=5 // pred_check
        %p92 = pneg %p91
      $region14: #{tpu_custom_call.1} parent=5 // pred_check_branch
        %94 = sbr.rel (%p92) target = $region16
      $region15: #{tpu_custom_call.1} parent=5 // pred_region
        // Predicated region
        $region17: #{tpu_custom_call.1} parent=15 // pred_check
          %p95 = pneg %p44
        $region18: #{tpu_custom_call.1} parent=15 // pred_check_branch
          %97 = sbr.rel (%p95) target = $region20
        $region19: #{tpu_custom_call.1} parent=15 // pred_region
          %s98 = sand.u32 %s34, 1
          %s99 = scalar_lea.sflag [#allocation3], %s98
          %s100 = sand.u32 %s34, 1
          %s101 = smul.addr %s100, 128
          %s102 = scalar_lea.vmem [#allocation2], %s101
          %s104 = ssub.s32 2048, 2048
          %105 = vsyncadd %s99, %s104
          %s106 = smul.addr %s17, 32
          %s107 = sadd.s32 %s18, %s106
          %s108 = smul.addr %s107, 128
          %s109 = scalar_lea.hbm %s0, %s108
          %s110 = sshll.u32 %s102, 4
          %s111 = int_to_ptr.vmem [resolvable:$true] %s110
          %116 = dma.hbm_to_vmem [thread:$0]  %s109, 2048, %s111, %s99, 256, 128, 8
        $region20: #{tpu_custom_call.1} parent=15 // pred_fallthru
          _
      $region16: #{tpu_custom_call.1} parent=5 // pred_fallthru
        _
      %p117 = scmp.le.s32.totalorder 1, %s10
      %p118 = scmp.lt.s32.totalorder %s10, 5
      %p119 = pnand %p117, %p118
      %p120 = pneg %p119
      // Predicated region
      $region21: #{tpu_custom_call.1} parent=5 // pred_check
        _
      $region22: #{tpu_custom_call.1} parent=5 // pred_check_branch
        %122 = sbr.rel (%p119) target = $region24
      $region23: #{tpu_custom_call.1} parent=5 // pred_region
        %s123 = ssub.s32 %s10, 1
        %s124 = sand.u32 %s37, 1
        %s125 = scalar_lea.sflag [#allocation3], %s124
        %s126 = sand.u32 %s37, 1
        %s127 = smul.addr %s126, 128
        %s128 = scalar_lea.vmem [#allocation2], %s127
        // Predicated region
        $region25: #{tpu_custom_call.1} parent=23 // pred_check
          %p129 = pneg %p50
        $region26: #{tpu_custom_call.1} parent=23 // pred_check_branch
          %131 = sbr.rel (%p129) target = $region28
        $region27: #{tpu_custom_call.1} parent=23 // pred_region
          %132 = dma.done %s125, 2048
        $region28: #{tpu_custom_call.1} parent=23 // pred_fallthru
          _
        %s133 = sand.u32 %s37, 1
        %s134 = scalar_lea.sflag [#allocation3], %s133
        %s135 = sand.u32 %s37, 1
        %s136 = smul.addr %s135, 128
        %s137 = scalar_lea.vmem [#allocation2], %s136
        %p138 = pneg %p50
        %p139 = pneg %p47
        %p140 = pneg %p76
        %p141 = pneg %p73
        %p142 = scmp.lt.s32.totalorder %s19, 1
        %s143 = scalar_select %p142, %s19, 1
        %s144 = smul.addr %s143, 16
        %s145 = smul.addr %s144, 8
        %s146 = scalar_lea.vmem %s1, %s145
        %p147 = scmp.lt.s32.totalorder %s19, 1
        %s148 = scalar_select %p147, %s19, 1
        %s149 = smul.addr %s148, 16
        %s150 = smul.addr %s149, 8
        %s151 = scalar_lea.vmem %s1, %s150
        %p152 = scmp.eq.s32.totalorder %s20, 0
        // Predicated region
        $region29: #{tpu_custom_call.1} parent=23 // pred_check
          %p153 = pneg %p152
        $region30: #{tpu_custom_call.1} parent=23 // pred_check_branch
          %155 = sbr.rel (%p153) target = $region32
        $region31: #{tpu_custom_call.1} parent=23 // pred_region
          %vm156 = vcmask 15360
          %157 = vst.msk [vmem:[%s151] sm:$0xff] %vm156, 0.0
          %158 = vst.msk [vmem:[%s151 + $0x8] sm:$0xff] %vm156, 0.0
          %159 = vst.msk [vmem:[%s151 + $0x10] sm:$0xff] %vm156, 0.0
          %160 = vst.msk [vmem:[%s151 + $0x18] sm:$0xff] %vm156, 0.0
          %161 = vst.msk [vmem:[%s151 + $0x20] sm:$0xff] %vm156, 0.0
          %162 = vst.msk [vmem:[%s151 + $0x28] sm:$0xff] %vm156, 0.0
          %163 = vst.msk [vmem:[%s151 + $0x30] sm:$0xff] %vm156, 0.0
          %164 = vst.msk [vmem:[%s151 + $0x38] sm:$0xff] %vm156, 0.0
          %165 = vst.msk [vmem:[%s151 + $0x40] sm:$0xff] %vm156, 0.0
          %166 = vst.msk [vmem:[%s151 + $0x48] sm:$0xff] %vm156, 0.0
          %167 = vst.msk [vmem:[%s151 + $0x50] sm:$0xff] %vm156, 0.0
          %168 = vst.msk [vmem:[%s151 + $0x58] sm:$0xff] %vm156, 0.0
          %169 = vst.msk [vmem:[%s151 + $0x60] sm:$0xff] %vm156, 0.0
          %170 = vst.msk [vmem:[%s151 + $0x68] sm:$0xff] %vm156, 0.0
          %171 = vst.msk [vmem:[%s151 + $0x70] sm:$0xff] %vm156, 0.0
          %172 = vst.msk [vmem:[%s151 + $0x78] sm:$0xff] %vm156, 0.0
        $region32: #{tpu_custom_call.1} parent=23 // pred_fallthru
          _
        %v173 = vld [vmem:[%s128] sm:$0xff]
        %v174 = vld [vmem:[%s128 + $0x8] sm:$0xff]
        %v175 = vld [vmem:[%s128 + $0x10] sm:$0xff]
        %v176 = vld [vmem:[%s128 + $0x18] sm:$0xff]
        %v177 = vld [vmem:[%s128 + $0x20] sm:$0xff]
        %v178 = vld [vmem:[%s128 + $0x28] sm:$0xff]
        %v179 = vld [vmem:[%s128 + $0x30] sm:$0xff]
        %v180 = vld [vmem:[%s128 + $0x38] sm:$0xff]
        %v181 = vld [vmem:[%s128 + $0x40] sm:$0xff]
        %v182 = vld [vmem:[%s128 + $0x48] sm:$0xff]
        %v183 = vld [vmem:[%s128 + $0x50] sm:$0xff]
        %v184 = vld [vmem:[%s128 + $0x58] sm:$0xff]
        %v185 = vld [vmem:[%s128 + $0x60] sm:$0xff]
        %v186 = vld [vmem:[%s128 + $0x68] sm:$0xff]
        %v187 = vld [vmem:[%s128 + $0x70] sm:$0xff]
        %v188 = vld [vmem:[%s128 + $0x78] sm:$0xff]
        %189 = vadd.xlane.f32.xlu0 %v173
        %v190 = vpop.xlane.xlu0 %189
        %191 = vadd.xlane.f32.xlu0 %v174
        %v192 = vpop.xlane.xlu0 %191
        %193 = vadd.xlane.f32.xlu0 %v175
        %v194 = vpop.xlane.xlu0 %193
        %195 = vadd.xlane.f32.xlu0 %v176
        %v196 = vpop.xlane.xlu0 %195
        %197 = vadd.xlane.f32.xlu0 %v177
        %v198 = vpop.xlane.xlu0 %197
        %199 = vadd.xlane.f32.xlu0 %v178
        %v200 = vpop.xlane.xlu0 %199
        %201 = vadd.xlane.f32.xlu0 %v179
        %v202 = vpop.xlane.xlu0 %201
        %203 = vadd.xlane.f32.xlu0 %v180
        %v204 = vpop.xlane.xlu0 %203
        %205 = vadd.xlane.f32.xlu0 %v181
        %v206 = vpop.xlane.xlu0 %205
        %207 = vadd.xlane.f32.xlu0 %v182
        %v208 = vpop.xlane.xlu0 %207
        %209 = vadd.xlane.f32.xlu0 %v183
        %v210 = vpop.xlane.xlu0 %209
        %211 = vadd.xlane.f32.xlu0 %v184
        %v212 = vpop.xlane.xlu0 %211
        %213 = vadd.xlane.f32.xlu0 %v185
        %v214 = vpop.xlane.xlu0 %213
        %215 = vadd.xlane.f32.xlu0 %v186
        %v216 = vpop.xlane.xlu0 %215
        %217 = vadd.xlane.f32.xlu0 %v187
        %v218 = vpop.xlane.xlu0 %217
        %219 = vadd.xlane.f32.xlu0 %v188
        %v220 = vpop.xlane.xlu0 %219
        %v221 = vmul.f32 %v173, %v173
        %v222 = vmul.f32 %v174, %v174
        %v223 = vmul.f32 %v175, %v175
        %v224 = vmul.f32 %v176, %v176
        %v225 = vmul.f32 %v177, %v177
        %v226 = vmul.f32 %v178, %v178
        %v227 = vmul.f32 %v179, %v179
        %v228 = vmul.f32 %v180, %v180
        %v229 = vmul.f32 %v181, %v181
        %v230 = vmul.f32 %v182, %v182
        %v231 = vmul.f32 %v183, %v183
        %v232 = vmul.f32 %v184, %v184
        %v233 = vmul.f32 %v185, %v185
        %v234 = vmul.f32 %v186, %v186
        %v235 = vmul.f32 %v187, %v187
        %v236 = vmul.f32 %v188, %v188
        %237 = vadd.xlane.f32.xlu0 %v221
        %v238 = vpop.xlane.xlu0 %237
        %239 = vadd.xlane.f32.xlu0 %v222
        %v240 = vpop.xlane.xlu0 %239
        %241 = vadd.xlane.f32.xlu0 %v223
        %v242 = vpop.xlane.xlu0 %241
        %243 = vadd.xlane.f32.xlu0 %v224
        %v244 = vpop.xlane.xlu0 %243
        %245 = vadd.xlane.f32.xlu0 %v225
        %v246 = vpop.xlane.xlu0 %245
        %247 = vadd.xlane.f32.xlu0 %v226
        %v248 = vpop.xlane.xlu0 %247
        %249 = vadd.xlane.f32.xlu0 %v227
        %v250 = vpop.xlane.xlu0 %249
        %251 = vadd.xlane.f32.xlu0 %v228
        %v252 = vpop.xlane.xlu0 %251
        %253 = vadd.xlane.f32.xlu0 %v229
        %v254 = vpop.xlane.xlu0 %253
        %255 = vadd.xlane.f32.xlu0 %v230
        %v256 = vpop.xlane.xlu0 %255
        %257 = vadd.xlane.f32.xlu0 %v231
        %v258 = vpop.xlane.xlu0 %257
        %259 = vadd.xlane.f32.xlu0 %v232
        %v260 = vpop.xlane.xlu0 %259
        %261 = vadd.xlane.f32.xlu0 %v233
        %v262 = vpop.xlane.xlu0 %261
        %263 = vadd.xlane.f32.xlu0 %v234
        %v264 = vpop.xlane.xlu0 %263
        %265 = vadd.xlane.f32.xlu0 %v235
        %v266 = vpop.xlane.xlu0 %265
        %267 = vadd.xlane.f32.xlu0 %v236
        %v268 = vpop.xlane.xlu0 %267
        %v269 = vld [vmem:[%s151] sm:$0xff]
        %v270 = vld [vmem:[%s151 + $0x8] sm:$0xff]
        %v271 = vld [vmem:[%s151 + $0x10] sm:$0xff]
        %v272 = vld [vmem:[%s151 + $0x18] sm:$0xff]
        %v273 = vld [vmem:[%s151 + $0x20] sm:$0xff]
        %v274 = vld [vmem:[%s151 + $0x28] sm:$0xff]
        %v275 = vld [vmem:[%s151 + $0x30] sm:$0xff]
        %v276 = vld [vmem:[%s151 + $0x38] sm:$0xff]
        %v277 = vld [vmem:[%s151 + $0x40] sm:$0xff]
        %v278 = vld [vmem:[%s151 + $0x48] sm:$0xff]
        %v279 = vld [vmem:[%s151 + $0x50] sm:$0xff]
        %v280 = vld [vmem:[%s151 + $0x58] sm:$0xff]
        %v281 = vld [vmem:[%s151 + $0x60] sm:$0xff]
        %v282 = vld [vmem:[%s151 + $0x68] sm:$0xff]
        %v283 = vld [vmem:[%s151 + $0x70] sm:$0xff]
        %v284 = vld [vmem:[%s151 + $0x78] sm:$0xff]
        %vm285 = vcmask 7168
        %v286 = vsel %vm285, %v190, %v238
        %v287 = vsel %vm285, %v192, %v240
        %v288 = vsel %vm285, %v194, %v242
        %v289 = vsel %vm285, %v196, %v244
        %v290 = vsel %vm285, %v198, %v246
        %v291 = vsel %vm285, %v200, %v248
        %v292 = vsel %vm285, %v202, %v250
        %v293 = vsel %vm285, %v204, %v252
        %v294 = vsel %vm285, %v206, %v254
        %v295 = vsel %vm285, %v208, %v256
        %v296 = vsel %vm285, %v210, %v258
        %v297 = vsel %vm285, %v212, %v260
        %v298 = vsel %vm285, %v214, %v262
        %v299 = vsel %vm285, %v216, %v264
        %v300 = vsel %vm285, %v218, %v266
        %v301 = vsel %vm285, %v220, %v268
        %v302 = vadd.f32 %v269, %v286
        %v303 = vadd.f32 %v270, %v287
        %v304 = vadd.f32 %v271, %v288
        %v305 = vadd.f32 %v272, %v289
        %v306 = vadd.f32 %v273, %v290
        %v307 = vadd.f32 %v274, %v291
        %v308 = vadd.f32 %v275, %v292
        %v309 = vadd.f32 %v276, %v293
        %v310 = vadd.f32 %v277, %v294
        %v311 = vadd.f32 %v278, %v295
        %v312 = vadd.f32 %v279, %v296
        %v313 = vadd.f32 %v280, %v297
        %v314 = vadd.f32 %v281, %v298
        %v315 = vadd.f32 %v282, %v299
        %v316 = vadd.f32 %v283, %v300
        %v317 = vadd.f32 %v284, %v301
        %vm318 = vcmask 15360
        %319 = vst.msk [vmem:[%s151] sm:$0xff] %vm318, %v302
        %320 = vst.msk [vmem:[%s151 + $0x8] sm:$0xff] %vm318, %v303
        %321 = vst.msk [vmem:[%s151 + $0x10] sm:$0xff] %vm318, %v304
        %322 = vst.msk [vmem:[%s151 + $0x18] sm:$0xff] %vm318, %v305
        %323 = vst.msk [vmem:[%s151 + $0x20] sm:$0xff] %vm318, %v306
        %324 = vst.msk [vmem:[%s151 + $0x28] sm:$0xff] %vm318, %v307
        %325 = vst.msk [vmem:[%s151 + $0x30] sm:$0xff] %vm318, %v308
        %326 = vst.msk [vmem:[%s151 + $0x38] sm:$0xff] %vm318, %v309
        %327 = vst.msk [vmem:[%s151 + $0x40] sm:$0xff] %vm318, %v310
        %328 = vst.msk [vmem:[%s151 + $0x48] sm:$0xff] %vm318, %v311
        %329 = vst.msk [vmem:[%s151 + $0x50] sm:$0xff] %vm318, %v312
        %330 = vst.msk [vmem:[%s151 + $0x58] sm:$0xff] %vm318, %v313
        %331 = vst.msk [vmem:[%s151 + $0x60] sm:$0xff] %vm318, %v314
        %332 = vst.msk [vmem:[%s151 + $0x68] sm:$0xff] %vm318, %v315
        %333 = vst.msk [vmem:[%s151 + $0x70] sm:$0xff] %vm318, %v316
        %334 = vst.msk [vmem:[%s151 + $0x78] sm:$0xff] %vm318, %v317
        %p335 = scmp.lt.s32.totalorder %s19, 1
        %s336 = scalar_select %p335, %s19, 1
        %s337 = smul.addr %s336, 16
        %s338 = smul.addr %s337, 8
        %s339 = scalar_lea.vmem %s1, %s338
        // Predicated region
        $region33: #{tpu_custom_call.1} parent=23 // pred_check
          %p340 = pneg %p73
        $region34: #{tpu_custom_call.1} parent=23 // pred_check_branch
          %342 = sbr.rel (%p340) target = $region36
        $region35: #{tpu_custom_call.1} parent=23 // pred_region
          _
        $region36: #{tpu_custom_call.1} parent=23 // pred_fallthru
          _
      $region24: #{tpu_custom_call.1} parent=5 // pred_fallthru
        _
      %p343 = scmp.le.s32.totalorder 2, %s10
      // Predicated region
      $region37: #{tpu_custom_call.1} parent=5 // pred_check
        %p344 = pneg %p343
      $region38: #{tpu_custom_call.1} parent=5 // pred_check_branch
        %346 = sbr.rel (%p344) target = $region40
      $region39: #{tpu_custom_call.1} parent=5 // pred_region
        %s347 = ssub.s32 %s10, 2
        // Predicated region
        $region41: #{tpu_custom_call.1} parent=39 // pred_check
          %p348 = pneg %p79
        $region42: #{tpu_custom_call.1} parent=39 // pred_check_branch
          %350 = sbr.rel (%p348) target = $region44
        $region43: #{tpu_custom_call.1} parent=39 // pred_region
          %p351 = scmp.lt.s32.totalorder %s21, 1
          %s352 = scalar_select %p351, %s21, 1
          %s353 = smul.addr %s352, 16
          %s354 = smul.addr %s353, 8
          %s355 = scalar_lea.vmem %s1, %s354
        $region44: #{tpu_custom_call.1} parent=39 // pred_fallthru
          _
      $region40: #{tpu_custom_call.1} parent=5 // pred_fallthru
        _
    $region6: #{tpu_custom_call.1} parent=1 // loop_footer
      %s14 = sadd.s32 1, %s10
    $region7: #{tpu_custom_call.1} parent=1 // loop_footer_branch
      %9 = sbr.rel target = $region3
    $region8: #{tpu_custom_call.1} parent=1 // loop_exit
      _
    %356 = vsyncpa [#allocation3], 1
    %s357 = scalar_lea.sflag [#allocation3], 1
    %358 = vsyncpa %s357, 1

</llo_original>
